<compile_context>
chip_gen: v6e
topology: v6e:2x2x1
jax: 0.10.0
libtpu: 0.0.40
codegen_flags: <defaults>
</compile_context>

<pallas_src>
import jax
import jax.numpy as jnp
from jax.experimental import pallas as pl
from jax.experimental.pallas import tpu as pltpu


# ---------------- activation registry (mirrors activationDict) --------------
def _relu(z):        return jnp.maximum(z, 0.0)
def _leaky_relu(z):  return jnp.where(z >= 0, z, 0.01 * z)          # nn.LeakyReLU default slope
def _sigmoid(z):     return 1.0 / (1.0 + jnp.exp(-z))               # exp on EUP
def _cos(z):         return jnp.cos(z)                              # Cosign
def _identity(z):    return z                                       # NoChange

_ACTIVATIONS = {
    'ReLu': _relu,
    'LeakyReLU': _leaky_relu,
    'Sigmoid': _sigmoid,
    'Cos': _cos,
    'noChange': _identity,
}


def _round_up(n, m):
    return -(-n // m) * m


# ---------------- fused whole-network kernel --------------------------------
def _make_fused_kernel(num_hidden, act_fns):
    """Flatten'd x -> [folded-BN Linear -> MultiActivation(concat)]*L -> Linear.

    refs = (x_ref, w1, b1, ..., wL, bL, w_final, b_final, o_ref).
    All intermediates stay on-chip; only o_ref (lane-dense, 128-wide padded)
    is written back.
    """
    def kernel(*refs):
        x_ref, o_ref = refs[0], refs[-1]
        p = refs[1:-1]

        h = x_ref[...]                                   # (tm, fin) f32
        for l in range(num_hidden):
            w = p[2 * l][...]
            b = p[2 * l + 1][...]
            # BN already folded into (w, b); straight MXU matmul.
            z = jnp.dot(h, w, preferred_element_type=jnp.float32) + b
            # MultiActivation: every activation, concat along features.
            h = jnp.concatenate([f(z) for f in act_fns], axis=-1)

        wf = p[-2][...]
        bf = p[-1][...]
        out = jnp.dot(h, wf, preferred_element_type=jnp.float32) + bf
        o_ref[...] = out.astype(o_ref.dtype)             # single lane-dense store
    return kernel


# ---------------- full BeansModule forward -----------------------------------
def beans_forward(x, params, activation_names, tm_max=512):
    """Pallas forward of BeansModule: Flatten -> [BN+Linear fused, MultiAct]*L -> Linear."""
    act_fns = [_ACTIVATIONS[name] for name in activation_names]
    num_hidden = len(params['hidden'])

    x = x.astype(jnp.float32)                            # x.to(torch.float)
    B = x.shape[0]
    h = x.reshape(B, -1)                                 # nn.Flatten()
    fin = h.shape[1]

    # ---- one-time parameter transforms (outside the hot path) --------------
    # Fold the inference-mode BN affine into each hidden Linear.
    folded = []
    for (scale, bias, w, b) in params['hidden']:
        w_f = scale.reshape(-1, 1) * w                   # (fin_l, hdim)
        b_f = bias @ w + b                               # (1, hdim)
        folded.append((w_f, b_f))

    # Pad the final Linear to a lane-dense (multiple of 128) output width so
    # the only HBM store is an unmasked full-width vst; slice off afterwards.
    wf, bf = params['final']
    n_out = wf.shape[1]
    n_pad = _round_up(max(n_out, 128), 128)
    wf_p = jnp.pad(wf, ((0, 0), (0, n_pad - n_out)))
    bf_p = jnp.pad(bf, ((0, 0), (0, n_pad - n_out)))

    # ---- row tiling ---------------------------------------------------------
    # Pad the batch only to the f32 sublane quantum (8); the grid uses cdiv so
    # no padding to a multiple of tm is needed (Pallas masks the ragged tail).
    B_pad = _round_up(B, 8)
    if B_pad != B:
        h = jnp.pad(h, ((0, B_pad - B), (0, 0)))
    tm = min(tm_max, B_pad)
    # v7x megacore: if there are enough rows for two blocks, cap tm so the
    # "parallel" row axis actually has >= 2 grid steps to shard across cores.
    if B_pad >= 16 and tm >= B_pad:
        tm = _round_up(pl.cdiv(B_pad, 2), 8)
    grid = (pl.cdiv(B_pad, tm),)

    # ---- specs: x tiled over rows; every parameter resident -----------------
    const = lambda i: (0, 0)
    in_specs = [pl.BlockSpec((tm, fin), lambda i: (i, 0))]
    flat_params = []
    for (w_f, b_f) in folded:
        in_specs.append(pl.BlockSpec(w_f.shape, const))
        in_specs.append(pl.BlockSpec(b_f.shape, const))
        flat_params += [w_f, b_f]
    in_specs.append(pl.BlockSpec(wf_p.shape, const))
    in_specs.append(pl.BlockSpec(bf_p.shape, const))
    flat_params += [wf_p, bf_p]

    out = pl.pallas_call(
        _make_fused_kernel(num_hidden, act_fns),
        out_shape=jax.ShapeDtypeStruct((B_pad, n_pad), jnp.float32),
        grid_spec=pltpu.PrefetchScalarGridSpec(
            num_scalar_prefetch=0,
            grid=grid,
            in_specs=in_specs,
            out_specs=pl.BlockSpec((tm, n_pad), lambda i: (i, 0)),
        ),
        compiler_params=pltpu.CompilerParams(
            dimension_semantics=("parallel",),           # megacore-shard rows on v7x
        ),
    )(h, *flat_params)

    return out[:B, :n_out]


# ---------------- pure-JAX reference (matches the PyTorch semantics) ---------
def beans_forward_ref(x, params, activation_names):
    act_fns = [_ACTIVATIONS[n] for n in activation_names]
    h = x.astype(jnp.float32).reshape(x.shape[0], -1)
    for (scale, bias, w, b) in params['hidden']:
        z = (h * scale + bias) @ w + b                   # unfolded BN affine
        h = jnp.concatenate([f(z) for f in act_fns], axis=1)
    w, b = params['final']
    return h @ w + b


# ---------------- deterministic parameter construction -----------------------
def init_params(key, in_features, out_features, activation_names,
                layer_size=20, num_layers=3, norm=True, eps=1e-5):
    n_acts = len(activation_names)
    params = {'hidden': [], 'final': None}
    cur = in_features
    for _ in range(num_layers):
        key, k_g, k_bt, k_m, k_v, k_w, k_b = jax.random.split(key, 7)
        if norm:
            gamma = 1.0 + 0.1 * jax.random.normal(k_g, (1, cur), jnp.float32)
            beta = 0.1 * jax.random.normal(k_bt, (1, cur), jnp.float32)
            mean = 0.1 * jax.random.normal(k_m, (1, cur), jnp.float32)
            var = jnp.abs(jax.random.normal(k_v, (1, cur), jnp.float32)) + 0.5
            scale = gamma / jnp.sqrt(var + eps)          # BN -> affine (inference)
            bias = beta - mean * scale
        else:
            scale = jnp.ones((1, cur), jnp.float32)
            bias = jnp.zeros((1, cur), jnp.float32)
        lim = 1.0 / float(cur) ** 0.5
        w = jax.random.uniform(k_w, (cur, layer_size), jnp.float32, -lim, lim)
        b = jax.random.uniform(k_b, (1, layer_size), jnp.float32, -lim, lim)
        params['hidden'].append((scale, bias, w, b))
        cur = layer_size * n_acts
    key, k_w, k_b = jax.random.split(key, 3)
    lim = 1.0 / float(cur) ** 0.5
    w = jax.random.uniform(k_w, (cur, out_features), jnp.float32, -lim, lim)
    b = jax.random.uniform(k_b, (1, out_features), jnp.float32, -lim, lim)
    params['final'] = (w, b)
    return params


if __name__ == "__main__":
    key = jax.random.PRNGKey(0)
    k_x, k_p = jax.random.split(key)

    # Small NCHW input; Flatten -> in_features = 4*16*16 = 1024.
    B, C, Hs, Ws = 2, 4, 16, 16
    x = jax.random.normal(k_x, (B, C, Hs, Ws), dtype=jnp.float32)

    activation_names = ['ReLu', 'Sigmoid', 'Cos']        # MultiActivation list
    in_features = C * Hs * Ws
    out_features = 10
    params = init_params(k_p, in_features, out_features, activation_names,
                         layer_size=20, num_layers=3, norm=True)

    out = beans_forward(x, params, activation_names)
    jax.block_until_ready(out)

    ref = beans_forward_ref(x, params, activation_names)
    assert out.shape == (B, out_features) and out.dtype == jnp.float32
    # Tolerance allows for the one-time BN->weight fold (different fp pairing).
    assert jnp.allclose(out, ref, rtol=1e-4, atol=1e-4), "mismatch vs reference"

    print("KERNEL_OK")
</pallas_src>

<mosaic_0001>
module attributes {stable_mosaic.version = 11 : i64} {
  func.func @kernel(%arg0: i32, %arg1: memref<8x1024xf32, #tpu.memory_space<vmem>>, %arg2: memref<1024x20xf32, #tpu.memory_space<vmem>>, %arg3: memref<1x20xf32, #tpu.memory_space<vmem>>, %arg4: memref<60x20xf32, #tpu.memory_space<vmem>>, %arg5: memref<1x20xf32, #tpu.memory_space<vmem>>, %arg6: memref<60x20xf32, #tpu.memory_space<vmem>>, %arg7: memref<1x20xf32, #tpu.memory_space<vmem>>, %arg8: memref<60x128xf32, #tpu.memory_space<vmem>>, %arg9: memref<1x128xf32, #tpu.memory_space<vmem>>, %arg10: memref<8x128xf32, #tpu.memory_space<vmem>>) attributes {dimension_semantics = [#tpu.dimension_semantics<parallel>], iteration_bounds = array<i64: 1>, scalar_prefetch = 0 : i64, scratch_operands = 0 : i64, tpu.core_type = #tpu.core_type<tc>, window_params = [{transform_indices = @transform_0, window_bounds = array<i64: 8, 1024>}, {pipeline_mode = #tpu.pipeline_mode<synchronous>, transform_indices = @transform_1, window_bounds = array<i64: 1024, 20>}, {pipeline_mode = #tpu.pipeline_mode<synchronous>, transform_indices = @transform_2, window_bounds = array<i64: 1, 20>}, {pipeline_mode = #tpu.pipeline_mode<synchronous>, transform_indices = @transform_3, window_bounds = array<i64: 60, 20>}, {pipeline_mode = #tpu.pipeline_mode<synchronous>, transform_indices = @transform_4, window_bounds = array<i64: 1, 20>}, {pipeline_mode = #tpu.pipeline_mode<synchronous>, transform_indices = @transform_5, window_bounds = array<i64: 60, 20>}, {pipeline_mode = #tpu.pipeline_mode<synchronous>, transform_indices = @transform_6, window_bounds = array<i64: 1, 20>}, {pipeline_mode = #tpu.pipeline_mode<synchronous>, transform_indices = @transform_7, window_bounds = array<i64: 60, 128>}, {pipeline_mode = #tpu.pipeline_mode<synchronous>, transform_indices = @transform_8, window_bounds = array<i64: 1, 128>}, {transform_indices = @transform_9, window_bounds = array<i64: 8, 128>}]} {
    %c0 = arith.constant 0 : index
    %c0_0 = arith.constant 0 : index
    %0 = vector.load %arg1[%c0, %c0_0] : memref<8x1024xf32, #tpu.memory_space<vmem>>, vector<8x1024xf32>
    %c0_1 = arith.constant 0 : index
    %c0_2 = arith.constant 0 : index
    %1 = vector.load %arg2[%c0_1, %c0_2] : memref<1024x20xf32, #tpu.memory_space<vmem>>, vector<1024x20xf32>
    %c0_3 = arith.constant 0 : index
    %c0_4 = arith.constant 0 : index
    %2 = vector.load %arg3[%c0_3, %c0_4] : memref<1x20xf32, #tpu.memory_space<vmem>>, vector<1x20xf32>
    %cst = arith.constant dense<0.000000e+00> : vector<8x20xf32>
    %3 = tpu.matmul %0, %1, %cst {dimension_numbers = #tpu.dot_dimension_numbers<[1], [0], [0], [1], [0, 0, 1, 1], [], []>} : vector<8x1024xf32>, vector<1024x20xf32>, vector<8x20xf32> -> vector<8x20xf32>
    %4 = vector.broadcast %2 : vector<1x20xf32> to vector<8x20xf32>
    %5 = arith.addf %3, %4 : vector<8x20xf32>
    %cst_5 = arith.constant 0.000000e+00 : f32
    %6 = vector.broadcast %cst_5 : f32 to vector<8x20xf32>
    %7 = arith.maximumf %5, %6 : vector<8x20xf32>
    %cst_6 = arith.constant 0.000000e+00 : f32
    %8 = vector.broadcast %cst_6 : f32 to vector<8x20xf32>
    %9 = arith.subf %8, %5 : vector<8x20xf32>
    %10 = math.exp %9 : vector<8x20xf32>
    %cst_7 = arith.constant 1.000000e+00 : f32
    %11 = vector.broadcast %cst_7 : f32 to vector<8x20xf32>
    %12 = arith.addf %11, %10 : vector<8x20xf32>
    %cst_8 = arith.constant 1.000000e+00 : f32
    %13 = vector.broadcast %cst_8 : f32 to vector<8x20xf32>
    %14 = arith.divf %13, %12 : vector<8x20xf32>
    %15 = math.cos %5 : vector<8x20xf32>
    %16 = tpu.concatenate %7, %14, %15 in 1 : vector<8x20xf32>, vector<8x20xf32>, vector<8x20xf32> -> vector<8x60xf32>
    %c0_9 = arith.constant 0 : index
    %c0_10 = arith.constant 0 : index
    %17 = vector.load %arg4[%c0_9, %c0_10] : memref<60x20xf32, #tpu.memory_space<vmem>>, vector<60x20xf32>
    %c0_11 = arith.constant 0 : index
    %c0_12 = arith.constant 0 : index
    %18 = vector.load %arg5[%c0_11, %c0_12] : memref<1x20xf32, #tpu.memory_space<vmem>>, vector<1x20xf32>
    %cst_13 = arith.constant dense<0.000000e+00> : vector<8x20xf32>
    %19 = tpu.matmul %16, %17, %cst_13 {dimension_numbers = #tpu.dot_dimension_numbers<[1], [0], [0], [1], [0, 0, 1, 1], [], []>} : vector<8x60xf32>, vector<60x20xf32>, vector<8x20xf32> -> vector<8x20xf32>
    %20 = vector.broadcast %18 : vector<1x20xf32> to vector<8x20xf32>
    %21 = arith.addf %19, %20 : vector<8x20xf32>
    %cst_14 = arith.constant 0.000000e+00 : f32
    %22 = vector.broadcast %cst_14 : f32 to vector<8x20xf32>
    %23 = arith.maximumf %21, %22 : vector<8x20xf32>
    %cst_15 = arith.constant 0.000000e+00 : f32
    %24 = vector.broadcast %cst_15 : f32 to vector<8x20xf32>
    %25 = arith.subf %24, %21 : vector<8x20xf32>
    %26 = math.exp %25 : vector<8x20xf32>
    %cst_16 = arith.constant 1.000000e+00 : f32
    %27 = vector.broadcast %cst_16 : f32 to vector<8x20xf32>
    %28 = arith.addf %27, %26 : vector<8x20xf32>
    %cst_17 = arith.constant 1.000000e+00 : f32
    %29 = vector.broadcast %cst_17 : f32 to vector<8x20xf32>
    %30 = arith.divf %29, %28 : vector<8x20xf32>
    %31 = math.cos %21 : vector<8x20xf32>
    %32 = tpu.concatenate %23, %30, %31 in 1 : vector<8x20xf32>, vector<8x20xf32>, vector<8x20xf32> -> vector<8x60xf32>
    %c0_18 = arith.constant 0 : index
    %c0_19 = arith.constant 0 : index
    %33 = vector.load %arg6[%c0_18, %c0_19] : memref<60x20xf32, #tpu.memory_space<vmem>>, vector<60x20xf32>
    %c0_20 = arith.constant 0 : index
    %c0_21 = arith.constant 0 : index
    %34 = vector.load %arg7[%c0_20, %c0_21] : memref<1x20xf32, #tpu.memory_space<vmem>>, vector<1x20xf32>
    %cst_22 = arith.constant dense<0.000000e+00> : vector<8x20xf32>
    %35 = tpu.matmul %32, %33, %cst_22 {dimension_numbers = #tpu.dot_dimension_numbers<[1], [0], [0], [1], [0, 0, 1, 1], [], []>} : vector<8x60xf32>, vector<60x20xf32>, vector<8x20xf32> -> vector<8x20xf32>
    %36 = vector.broadcast %34 : vector<1x20xf32> to vector<8x20xf32>
    %37 = arith.addf %35, %36 : vector<8x20xf32>
    %cst_23 = arith.constant 0.000000e+00 : f32
    %38 = vector.broadcast %cst_23 : f32 to vector<8x20xf32>
    %39 = arith.maximumf %37, %38 : vector<8x20xf32>
    %cst_24 = arith.constant 0.000000e+00 : f32
    %40 = vector.broadcast %cst_24 : f32 to vector<8x20xf32>
    %41 = arith.subf %40, %37 : vector<8x20xf32>
    %42 = math.exp %41 : vector<8x20xf32>
    %cst_25 = arith.constant 1.000000e+00 : f32
    %43 = vector.broadcast %cst_25 : f32 to vector<8x20xf32>
    %44 = arith.addf %43, %42 : vector<8x20xf32>
    %cst_26 = arith.constant 1.000000e+00 : f32
    %45 = vector.broadcast %cst_26 : f32 to vector<8x20xf32>
    %46 = arith.divf %45, %44 : vector<8x20xf32>
    %47 = math.cos %37 : vector<8x20xf32>
    %48 = tpu.concatenate %39, %46, %47 in 1 : vector<8x20xf32>, vector<8x20xf32>, vector<8x20xf32> -> vector<8x60xf32>
    %c0_27 = arith.constant 0 : index
    %c0_28 = arith.constant 0 : index
    %49 = vector.load %arg8[%c0_27, %c0_28] : memref<60x128xf32, #tpu.memory_space<vmem>>, vector<60x128xf32>
    %c0_29 = arith.constant 0 : index
    %c0_30 = arith.constant 0 : index
    %50 = vector.load %arg9[%c0_29, %c0_30] : memref<1x128xf32, #tpu.memory_space<vmem>>, vector<1x128xf32>
    %cst_31 = arith.constant dense<0.000000e+00> : vector<8x128xf32>
    %51 = tpu.matmul %48, %49, %cst_31 {dimension_numbers = #tpu.dot_dimension_numbers<[1], [0], [0], [1], [0, 0, 1, 1], [], []>} : vector<8x60xf32>, vector<60x128xf32>, vector<8x128xf32> -> vector<8x128xf32>
    %52 = vector.broadcast %50 : vector<1x128xf32> to vector<8x128xf32>
    %53 = arith.addf %51, %52 : vector<8x128xf32>
    %c0_32 = arith.constant 0 : index
    %c0_33 = arith.constant 0 : index
    %54 = vector.load %arg10[%c0_32, %c0_33] : memref<8x128xf32, #tpu.memory_space<vmem>>, vector<8x128xf32>
    tpu.vector_store %arg10[%c0_32, %c0_33], %53 {strides = array<i32>} : memref<8x128xf32, #tpu.memory_space<vmem>>, vector<8x128xf32>,
    return
  }
  func.func @transform_0(%arg0: i32) -> (i32, i32) {
    %c0_i32 = arith.constant 0 : i32
    %c0_i32_0 = arith.constant 0 : i32
    return %arg0, %c0_i32 : i32, i32
  }
  func.func @transform_1(%arg0: i32) -> (i32, i32) {
    %c0_i32 = arith.constant 0 : i32
    %c0_i32_0 = arith.constant 0 : i32
    %c0_i32_1 = arith.constant 0 : i32
    return %c0_i32, %c0_i32_0 : i32, i32
  }
  func.func @transform_2(%arg0: i32) -> (i32, i32) {
    %c0_i32 = arith.constant 0 : i32
    %c0_i32_0 = arith.constant 0 : i32
    %c0_i32_1 = arith.constant 0 : i32
    return %c0_i32, %c0_i32_0 : i32, i32
  }
  func.func @transform_3(%arg0: i32) -> (i32, i32) {
    %c0_i32 = arith.constant 0 : i32
    %c0_i32_0 = arith.constant 0 : i32
    %c0_i32_1 = arith.constant 0 : i32
    return %c0_i32, %c0_i32_0 : i32, i32
  }
  func.func @transform_4(%arg0: i32) -> (i32, i32) {
    %c0_i32 = arith.constant 0 : i32
    %c0_i32_0 = arith.constant 0 : i32
    %c0_i32_1 = arith.constant 0 : i32
    return %c0_i32, %c0_i32_0 : i32, i32
  }
  func.func @transform_5(%arg0: i32) -> (i32, i32) {
    %c0_i32 = arith.constant 0 : i32
    %c0_i32_0 = arith.constant 0 : i32
    %c0_i32_1 = arith.constant 0 : i32
    return %c0_i32, %c0_i32_0 : i32, i32
  }
  func.func @transform_6(%arg0: i32) -> (i32, i32) {
    %c0_i32 = arith.constant 0 : i32
    %c0_i32_0 = arith.constant 0 : i32
    %c0_i32_1 = arith.constant 0 : i32
    return %c0_i32, %c0_i32_0 : i32, i32
  }
  func.func @transform_7(%arg0: i32) -> (i32, i32) {
    %c0_i32 = arith.constant 0 : i32
    %c0_i32_0 = arith.constant 0 : i32
    %c0_i32_1 = arith.constant 0 : i32
    return %c0_i32, %c0_i32_0 : i32, i32
  }
  func.func @transform_8(%arg0: i32) -> (i32, i32) {
    %c0_i32 = arith.constant 0 : i32
    %c0_i32_0 = arith.constant 0 : i32
    %c0_i32_1 = arith.constant 0 : i32
    return %c0_i32, %c0_i32_0 : i32, i32
  }
  func.func @transform_9(%arg0: i32) -> (i32, i32) {
    %c0_i32 = arith.constant 0 : i32
    %c0_i32_0 = arith.constant 0 : i32
    return %arg0, %c0_i32 : i32, i32
  }
}

</mosaic_0001>

<llo_original>
// kernel: tpu_custom_call.1
$region0: #{tpu_custom_call.1}
  #allocation0 [shape = 'u32[]', space=smem, size = 0x4, offset = 0x4, fixed_abs, tag = 'smem constant byte address 0x4 - core index']
  #allocation1 [shape = 'u32[144,128]{1,0:T(1,128)}', space=vmem, size = 0x12000, scoped, tag = 'internal scratch']
  %s0 = inlined_call_operand.vmem [shape: f32[8,1024], index: 0, kind: input, shape index: {}]
  %s1 = inlined_call_operand.vmem [shape: f32[1024,20], index: 1, kind: input, shape index: {}]
  %s2 = inlined_call_operand.vmem [shape: f32[1,20], index: 2, kind: input, shape index: {}]
  %s3 = inlined_call_operand.vmem [shape: f32[60,20], index: 3, kind: input, shape index: {}]
  %s4 = inlined_call_operand.vmem [shape: f32[1,20], index: 4, kind: input, shape index: {}]
  %s5 = inlined_call_operand.vmem [shape: f32[60,20], index: 5, kind: input, shape index: {}]
  %s6 = inlined_call_operand.vmem [shape: f32[1,20], index: 6, kind: input, shape index: {}]
  %s7 = inlined_call_operand.vmem [shape: f32[60,128], index: 7, kind: input, shape index: {}]
  %s8 = inlined_call_operand.vmem [shape: f32[1,128], index: 8, kind: input, shape index: {}]
  %s9 = inlined_call_operand.hbm [shape: f32[8,128], index: 9, kind: output, shape index: {}]
  %s10 = sld [smem:[#allocation0]]
  $region46: #{tpu_custom_call.1} parent=0
    _
  %s12 = ssub.s32 1, %s10
  %s13 = scalar_select 0, %s12, %s10
  $region1: #{tpu_custom_call.1} parent=0
    #allocation2 [shape = 'u8[4096]{0}', space=vmem, size = 0x1000, scoped, tag = 'output window, operand 0, single buffered']
    #allocation3 [shape = 's32[1]{0}', space=sflag, size = 0x4, scoped, tag = 'scoped memory for tpu_custom_call.1']
    %14 = vsyncpa [#allocation3], 0
    // Predicated region
    $region2: #{tpu_custom_call.1} parent=1 // pred_check
      _
    $region3: #{tpu_custom_call.1} parent=1 // pred_check_branch
      %16 = sbr.rel (0) target = $region5
    $region4: #{tpu_custom_call.1} parent=1 // pred_region
      _
    $region5: #{tpu_custom_call.1} parent=1 // pred_fallthru
      _
    // Predicated region
    $region6: #{tpu_custom_call.1} parent=1 // pred_check
      _
    $region7: #{tpu_custom_call.1} parent=1 // pred_check_branch
      %18 = sbr.rel (0) target = $region9
    $region8: #{tpu_custom_call.1} parent=1 // pred_region
      _
    $region9: #{tpu_custom_call.1} parent=1 // pred_fallthru
      _
    // Predicated region
    $region10: #{tpu_custom_call.1} parent=1 // pred_check
      _
    $region11: #{tpu_custom_call.1} parent=1 // pred_check_branch
      %20 = sbr.rel (0) target = $region13
    $region12: #{tpu_custom_call.1} parent=1 // pred_region
      _
    $region13: #{tpu_custom_call.1} parent=1 // pred_fallthru
      _
    // Predicated region
    $region14: #{tpu_custom_call.1} parent=1 // pred_check
      _
    $region15: #{tpu_custom_call.1} parent=1 // pred_check_branch
      %22 = sbr.rel (0) target = $region17
    $region16: #{tpu_custom_call.1} parent=1 // pred_region
      _
    $region17: #{tpu_custom_call.1} parent=1 // pred_fallthru
      _
    // Predicated region
    $region18: #{tpu_custom_call.1} parent=1 // pred_check
      _
    $region19: #{tpu_custom_call.1} parent=1 // pred_check_branch
      %24 = sbr.rel (0) target = $region21
    $region20: #{tpu_custom_call.1} parent=1 // pred_region
      _
    $region21: #{tpu_custom_call.1} parent=1 // pred_fallthru
      _
    // Predicated region
    $region22: #{tpu_custom_call.1} parent=1 // pred_check
      _
    $region23: #{tpu_custom_call.1} parent=1 // pred_check_branch
      %26 = sbr.rel (0) target = $region25
    $region24: #{tpu_custom_call.1} parent=1 // pred_region
      _
    $region25: #{tpu_custom_call.1} parent=1 // pred_fallthru
      _
    // Predicated region
    $region26: #{tpu_custom_call.1} parent=1 // pred_check
      _
    $region27: #{tpu_custom_call.1} parent=1 // pred_check_branch
      %28 = sbr.rel (0) target = $region29
    $region28: #{tpu_custom_call.1} parent=1 // pred_region
      _
    $region29: #{tpu_custom_call.1} parent=1 // pred_fallthru
      _
    // Predicated region
    $region30: #{tpu_custom_call.1} parent=1 // pred_check
      _
    $region31: #{tpu_custom_call.1} parent=1 // pred_check_branch
      %30 = sbr.rel (0) target = $region33
    $region32: #{tpu_custom_call.1} parent=1 // pred_region
      _
    $region33: #{tpu_custom_call.1} parent=1 // pred_fallthru
      _
    // Predicated region
    $region34: #{tpu_custom_call.1} parent=1 // pred_check
      _
    $region35: #{tpu_custom_call.1} parent=1 // pred_check_branch
      %32 = sbr.rel (0) target = $region37
    $region36: #{tpu_custom_call.1} parent=1 // pred_region
      _
    $region37: #{tpu_custom_call.1} parent=1 // pred_fallthru
      _
    %v33 = vld [vmem:[%s0] sm:$0xff]
    %v34 = vld [vmem:[%s0 + $0x8] sm:$0xff]
    %v35 = vld [vmem:[%s0 + $0x10] sm:$0xff]
    %v36 = vld [vmem:[%s0 + $0x18] sm:$0xff]
    %v37 = vld [vmem:[%s0 + $0x20] sm:$0xff]
    %v38 = vld [vmem:[%s0 + $0x28] sm:$0xff]
    %v39 = vld [vmem:[%s0 + $0x30] sm:$0xff]
    %v40 = vld [vmem:[%s0 + $0x38] sm:$0xff]
    %v41 = vld [vmem:[%s1] sm:$0xff]
    %v42 = vld [vmem:[%s1 + $0x8] sm:$0xff]
    %v43 = vld [vmem:[%s1 + $0x10] sm:$0xff]
    %v44 = vld [vmem:[%s1 + $0x18] sm:$0xff]
    %v45 = vld [vmem:[%s1 + $0x20] sm:$0xff]
    %v46 = vld [vmem:[%s1 + $0x28] sm:$0xff]
    %v47 = vld [vmem:[%s1 + $0x30] sm:$0xff]
    %v48 = vld [vmem:[%s1 + $0x38] sm:$0xff]
    %v49 = vld [vmem:[%s1 + $0x40] sm:$0xff]
    %v50 = vld [vmem:[%s1 + $0x48] sm:$0xff]
    %v51 = vld [vmem:[%s1 + $0x50] sm:$0xff]
    %v52 = vld [vmem:[%s1 + $0x58] sm:$0xff]
    %v53 = vld [vmem:[%s1 + $0x60] sm:$0xff]
    %v54 = vld [vmem:[%s1 + $0x68] sm:$0xff]
    %v55 = vld [vmem:[%s1 + $0x70] sm:$0xff]
    %v56 = vld [vmem:[%s1 + $0x78] sm:$0xff]
    %v57 = vld [vmem:[%s1 + $0x80] sm:$0xff]
    %v58 = vld [vmem:[%s1 + $0x88] sm:$0xff]
    %v59 = vld [vmem:[%s1 + $0x90] sm:$0xff]
    %v60 = vld [vmem:[%s1 + $0x98] sm:$0xff]
    %v61 = vld [vmem:[%s1 + $0xa0] sm:$0xff]
    %v62 = vld [vmem:[%s1 + $0xa8] sm:$0xff]
    %v63 = vld [vmem:[%s1 + $0xb0] sm:$0xff]
    %v64 = vld [vmem:[%s1 + $0xb8] sm:$0xff]
    %v65 = vld [vmem:[%s1 + $0xc0] sm:$0xff]
    %v66 = vld [vmem:[%s1 + $0xc8] sm:$0xff]
    %v67 = vld [vmem:[%s1 + $0xd0] sm:$0xff]
    %v68 = vld [vmem:[%s1 + $0xd8] sm:$0xff]
    %v69 = vld [vmem:[%s1 + $0xe0] sm:$0xff]
    %v70 = vld [vmem:[%s1 + $0xe8] sm:$0xff]
    %v71 = vld [vmem:[%s1 + $0xf0] sm:$0xff]
    %v72 = vld [vmem:[%s1 + $0xf8] sm:$0xff]
    %v73 = vld [vmem:[%s1 + $0x100] sm:$0xff]
    %v74 = vld [vmem:[%s1 + $0x108] sm:$0xff]
    %v75 = vld [vmem:[%s1 + $0x110] sm:$0xff]
    %v76 = vld [vmem:[%s1 + $0x118] sm:$0xff]
    %v77 = vld [vmem:[%s1 + $0x120] sm:$0xff]
    %v78 = vld [vmem:[%s1 + $0x128] sm:$0xff]
    %v79 = vld [vmem:[%s1 + $0x130] sm:$0xff]
    %v80 = vld [vmem:[%s1 + $0x138] sm:$0xff]
    %v81 = vld [vmem:[%s1 + $0x140] sm:$0xff]
    %v82 = vld [vmem:[%s1 + $0x148] sm:$0xff]
    %v83 = vld [vmem:[%s1 + $0x150] sm:$0xff]
    %v84 = vld [vmem:[%s1 + $0x158] sm:$0xff]
    %v85 = vld [vmem:[%s1 + $0x160] sm:$0xff]
    %v86 = vld [vmem:[%s1 + $0x168] sm:$0xff]
    %v87 = vld [vmem:[%s1 + $0x170] sm:$0xff]
    %v88 = vld [vmem:[%s1 + $0x178] sm:$0xff]
    %v89 = vld [vmem:[%s1 + $0x180] sm:$0xff]
    %v90 = vld [vmem:[%s1 + $0x188] sm:$0xff]
    %v91 = vld [vmem:[%s1 + $0x190] sm:$0xff]
    %v92 = vld [vmem:[%s1 + $0x198] sm:$0xff]
    %v93 = vld [vmem:[%s1 + $0x1a0] sm:$0xff]
    %v94 = vld [vmem:[%s1 + $0x1a8] sm:$0xff]
    %v95 = vld [vmem:[%s1 + $0x1b0] sm:$0xff]
    %v96 = vld [vmem:[%s1 + $0x1b8] sm:$0xff]
    %v97 = vld [vmem:[%s1 + $0x1c0] sm:$0xff]
    %v98 = vld [vmem:[%s1 + $0x1c8] sm:$0xff]
    %v99 = vld [vmem:[%s1 + $0x1d0] sm:$0xff]
    %v100 = vld [vmem:[%s1 + $0x1d8] sm:$0xff]
    %v101 = vld [vmem:[%s1 + $0x1e0] sm:$0xff]
    %v102 = vld [vmem:[%s1 + $0x1e8] sm:$0xff]
    %v103 = vld [vmem:[%s1 + $0x1f0] sm:$0xff]
    %v104 = vld [vmem:[%s1 + $0x1f8] sm:$0xff]
    %v105 = vld [vmem:[%s1 + $0x200] sm:$0xff]
    %v106 = vld [vmem:[%s1 + $0x208] sm:$0xff]
    %v107 = vld [vmem:[%s1 + $0x210] sm:$0xff]
    %v108 = vld [vmem:[%s1 + $0x218] sm:$0xff]
    %v109 = vld [vmem:[%s1 + $0x220] sm:$0xff]
    %v110 = vld [vmem:[%s1 + $0x228] sm:$0xff]
    %v111 = vld [vmem:[%s1 + $0x230] sm:$0xff]
    %v112 = vld [vmem:[%s1 + $0x238] sm:$0xff]
    %v113 = vld [vmem:[%s1 + $0x240] sm:$0xff]
    %v114 = vld [vmem:[%s1 + $0x248] sm:$0xff]
    %v115 = vld [vmem:[%s1 + $0x250] sm:$0xff]
    %v116 = vld [vmem:[%s1 + $0x258] sm:$0xff]
    %v117 = vld [vmem:[%s1 + $0x260] sm:$0xff]
    %v118 = vld [vmem:[%s1 + $0x268] sm:$0xff]
    %v119 = vld [vmem:[%s1 + $0x270] sm:$0xff]
    %v120 = vld [vmem:[%s1 + $0x278] sm:$0xff]
    %v121 = vld [vmem:[%s1 + $0x280] sm:$0xff]
    %v122 = vld [vmem:[%s1 + $0x288] sm:$0xff]
    %v123 = vld [vmem:[%s1 + $0x290] sm:$0xff]
    %v124 = vld [vmem:[%s1 + $0x298] sm:$0xff]
    %v125 = vld [vmem:[%s1 + $0x2a0] sm:$0xff]
    %v126 = vld [vmem:[%s1 + $0x2a8] sm:$0xff]
    %v127 = vld [vmem:[%s1 + $0x2b0] sm:$0xff]
    %v128 = vld [vmem:[%s1 + $0x2b8] sm:$0xff]
    %v129 = vld [vmem:[%s1 + $0x2c0] sm:$0xff]
    %v130 = vld [vmem:[%s1 + $0x2c8] sm:$0xff]
    %v131 = vld [vmem:[%s1 + $0x2d0] sm:$0xff]
    %v132 = vld [vmem:[%s1 + $0x2d8] sm:$0xff]
    %v133 = vld [vmem:[%s1 + $0x2e0] sm:$0xff]
    %v134 = vld [vmem:[%s1 + $0x2e8] sm:$0xff]
    %v135 = vld [vmem:[%s1 + $0x2f0] sm:$0xff]
    %v136 = vld [vmem:[%s1 + $0x2f8] sm:$0xff]
    %v137 = vld [vmem:[%s1 + $0x300] sm:$0xff]
    %v138 = vld [vmem:[%s1 + $0x308] sm:$0xff]
    %v139 = vld [vmem:[%s1 + $0x310] sm:$0xff]
    %v140 = vld [vmem:[%s1 + $0x318] sm:$0xff]
    %v141 = vld [vmem:[%s1 + $0x320] sm:$0xff]
    %v142 = vld [vmem:[%s1 + $0x328] sm:$0xff]
    %v143 = vld [vmem:[%s1 + $0x330] sm:$0xff]
    %v144 = vld [vmem:[%s1 + $0x338] sm:$0xff]
    %v145 = vld [vmem:[%s1 + $0x340] sm:$0xff]
    %v146 = vld [vmem:[%s1 + $0x348] sm:$0xff]
    %v147 = vld [vmem:[%s1 + $0x350] sm:$0xff]
    %v148 = vld [vmem:[%s1 + $0x358] sm:$0xff]
    %v149 = vld [vmem:[%s1 + $0x360] sm:$0xff]
    %v150 = vld [vmem:[%s1 + $0x368] sm:$0xff]
    %v151 = vld [vmem:[%s1 + $0x370] sm:$0xff]
    %v152 = vld [vmem:[%s1 + $0x378] sm:$0xff]
    %v153 = vld [vmem:[%s1 + $0x380] sm:$0xff]
    %v154 = vld [vmem:[%s1 + $0x388] sm:$0xff]
    %v155 = vld [vmem:[%s1 + $0x390] sm:$0xff]
    %v156 = vld [vmem:[%s1 + $0x398] sm:$0xff]
    %v157 = vld [vmem:[%s1 + $0x3a0] sm:$0xff]
    %v158 = vld [vmem:[%s1 + $0x3a8] sm:$0xff]
    %v159 = vld [vmem:[%s1 + $0x3b0] sm:$0xff]
    %v160 = vld [vmem:[%s1 + $0x3b8] sm:$0xff]
    %v161 = vld [vmem:[%s1 + $0x3c0] sm:$0xff]
    %v162 = vld [vmem:[%s1 + $0x3c8] sm:$0xff]
    %v163 = vld [vmem:[%s1 + $0x3d0] sm:$0xff]
    %v164 = vld [vmem:[%s1 + $0x3d8] sm:$0xff]
    %v165 = vld [vmem:[%s1 + $0x3e0] sm:$0xff]
    %v166 = vld [vmem:[%s1 + $0x3e8] sm:$0xff]
    %v167 = vld [vmem:[%s1 + $0x3f0] sm:$0xff]
    %v168 = vld [vmem:[%s1 + $0x3f8] sm:$0xff]
    %v169 = vld [vmem:[%s2] sm:$0x1]
    %v171 = vlaneseq
    %v172 = vshrl.u32 %v171, 7
    %v173 = vsub.s32 0, %v172
    %v174 = vrot.slane %v169, %v173
    %176 = vmatprep.subr.mxu0 0.0
    %177 = vmatpush1.msra.mxu0 %v56
    %178 = vmatprep.subr.mxu0 0.0
    %179 = vmatpush1.msra.mxu0 %v55
    %180 = vmatprep.subr.mxu0 0.0
    %181 = vmatpush1.msra.mxu0 %v54
    %182 = vmatprep.subr.mxu0 0.0
    %183 = vmatpush1.msra.mxu0 %v53
    %184 = vmatprep.subr.mxu0 0.0
    %185 = vmatpush1.msra.mxu0 %v52
    %186 = vmatprep.subr.mxu0 0.0
    %187 = vmatpush1.msra.mxu0 %v51
    %188 = vmatprep.subr.mxu0 0.0
    %189 = vmatpush1.msra.mxu0 %v50
    %190 = vmatprep.subr.mxu0 0.0
    %191 = vmatpush1.msra.mxu0 %v49
    %192 = vmatprep.subr.mxu0 0.0
    %193 = vmatpush1.msra.mxu0 %v48
    %194 = vmatprep.subr.mxu0 0.0
    %195 = vmatpush1.msra.mxu0 %v47
    %196 = vmatprep.subr.mxu0 0.0
    %197 = vmatpush1.msra.mxu0 %v46
    %198 = vmatprep.subr.mxu0 0.0
    %199 = vmatpush1.msra.mxu0 %v45
    %200 = vmatprep.subr.mxu0 0.0
    %201 = vmatpush1.msra.mxu0 %v44
    %202 = vmatprep.subr.mxu0 0.0
    %203 = vmatpush1.msra.mxu0 %v43
    %204 = vmatprep.subr.mxu0 0.0
    %205 = vmatpush1.msra.mxu0 %v42
    %206 = vmatprep.subr.mxu0 0.0
    %207 = vmatpush1.msra.mxu0 %v41
    %208 = vmatprep.subr.mxu0 0.0
    %209 = vmatpush2.msra.mxu0 %v72
    %210 = vmatprep.subr.mxu0 0.0
    %211 = vmatpush2.msra.mxu0 %v71
    %212 = vmatprep.subr.mxu0 0.0
    %213 = vmatpush2.msra.mxu0 %v70
    %214 = vmatprep.subr.mxu0 0.0
    %215 = vmatpush2.msra.mxu0 %v69
    %216 = vmatprep.subr.mxu0 0.0
    %217 = vmatpush2.msra.mxu0 %v68
    %218 = vmatprep.subr.mxu0 0.0
    %219 = vmatpush2.msra.mxu0 %v67
    %220 = vmatprep.subr.mxu0 0.0
    %221 = vmatpush2.msra.mxu0 %v66
    %222 = vmatprep.subr.mxu0 0.0
    %223 = vmatpush2.msra.mxu0 %v65
    %224 = vmatprep.subr.mxu0 0.0
    %225 = vmatpush2.msra.mxu0 %v64
    %226 = vmatprep.subr.mxu0 0.0
    %227 = vmatpush2.msra.mxu0 %v63
    %228 = vmatprep.subr.mxu0 0.0
    %229 = vmatpush2.msra.mxu0 %v62
    %230 = vmatprep.subr.mxu0 0.0
    %231 = vmatpush2.msra.mxu0 %v61
    %232 = vmatprep.subr.mxu0 0.0
    %233 = vmatpush2.msra.mxu0 %v60
    %234 = vmatprep.subr.mxu0 0.0
    %235 = vmatpush2.msra.mxu0 %v59
    %236 = vmatprep.subr.mxu0 0.0
    %237 = vmatpush2.msra.mxu0 %v58
    %238 = vmatprep.subr.mxu0 0.0
    %239 = vmatpush2.msra.mxu0 %v57
    %240 = vmatprep.mubr.f32.mxu0 %v34
    %241 = vmatmul.mubr.f32.gmra.mxu0 %v33
    %v242 = vpop.f32.mrf.mxu0
    %v243 = vadd.f32 %v174, %v242
    %v244 = vpop.f32.mrf.mxu0
    %245 = vdwg.mxu0
    %246 = vmatprep.subr.mxu0 0.0
    %247 = vmatpush1.msra.mxu0 %v88
    %248 = vmatprep.subr.mxu0 0.0
    %249 = vmatpush1.msra.mxu0 %v87
    %250 = vmatprep.subr.mxu0 0.0
    %251 = vmatpush1.msra.mxu0 %v86
    %252 = vmatprep.subr.mxu0 0.0
    %253 = vmatpush1.msra.mxu0 %v85
    %254 = vmatprep.subr.mxu0 0.0
    %255 = vmatpush1.msra.mxu0 %v84
    %256 = vmatprep.subr.mxu0 0.0
    %257 = vmatpush1.msra.mxu0 %v83
    %258 = vmatprep.subr.mxu0 0.0
    %259 = vmatpush1.msra.mxu0 %v82
    %260 = vmatprep.subr.mxu0 0.0
    %261 = vmatpush1.msra.mxu0 %v81
    %262 = vmatprep.subr.mxu0 0.0
    %263 = vmatpush1.msra.mxu0 %v80
    %264 = vmatprep.subr.mxu0 0.0
    %265 = vmatpush1.msra.mxu0 %v79
    %266 = vmatprep.subr.mxu0 0.0
    %267 = vmatpush1.msra.mxu0 %v78
    %268 = vmatprep.subr.mxu0 0.0
    %269 = vmatpush1.msra.mxu0 %v77
    %270 = vmatprep.subr.mxu0 0.0
    %271 = vmatpush1.msra.mxu0 %v76
    %272 = vmatprep.subr.mxu0 0.0
    %273 = vmatpush1.msra.mxu0 %v75
    %274 = vmatprep.subr.mxu0 0.0
    %275 = vmatpush1.msra.mxu0 %v74
    %276 = vmatprep.subr.mxu0 0.0
    %277 = vmatpush1.msra.mxu0 %v73
    %278 = vmatprep.subr.mxu0 0.0
    %279 = vmatpush2.msra.mxu0 %v104
    %280 = vmatprep.subr.mxu0 0.0
    %281 = vmatpush2.msra.mxu0 %v103
    %282 = vmatprep.subr.mxu0 0.0
    %283 = vmatpush2.msra.mxu0 %v102
    %284 = vmatprep.subr.mxu0 0.0
    %285 = vmatpush2.msra.mxu0 %v101
    %286 = vmatprep.subr.mxu0 0.0
    %287 = vmatpush2.msra.mxu0 %v100
    %288 = vmatprep.subr.mxu0 0.0
    %289 = vmatpush2.msra.mxu0 %v99
    %290 = vmatprep.subr.mxu0 0.0
    %291 = vmatpush2.msra.mxu0 %v98
    %292 = vmatprep.subr.mxu0 0.0
    %293 = vmatpush2.msra.mxu0 %v97
    %294 = vmatprep.subr.mxu0 0.0
    %295 = vmatpush2.msra.mxu0 %v96
    %296 = vmatprep.subr.mxu0 0.0
    %297 = vmatpush2.msra.mxu0 %v95
    %298 = vmatprep.subr.mxu0 0.0
    %299 = vmatpush2.msra.mxu0 %v94
    %300 = vmatprep.subr.mxu0 0.0
    %301 = vmatpush2.msra.mxu0 %v93
    %302 = vmatprep.subr.mxu0 0.0
    %303 = vmatpush2.msra.mxu0 %v92
    %304 = vmatprep.subr.mxu0 0.0
    %305 = vmatpush2.msra.mxu0 %v91
    %306 = vmatprep.subr.mxu0 0.0
    %307 = vmatpush2.msra.mxu0 %v90
    %308 = vmatprep.subr.mxu0 0.0
    %309 = vmatpush2.msra.mxu0 %v89
    %310 = vmatprep.mubr.f32.mxu0 %v36
    %311 = vmatmul.mubr.f32.gmra.mxu0 %v35
    %v312 = vpop.f32.mrf.mxu0
    %v313 = vadd.f32 %v243, %v312
    %v314 = vpop.f32.mrf.mxu0
    %315 = vdwg.mxu0
    %316 = vmatprep.subr.mxu0 0.0
    %317 = vmatpush1.msra.mxu0 %v120
    %318 = vmatprep.subr.mxu0 0.0
    %319 = vmatpush1.msra.mxu0 %v119
    %320 = vmatprep.subr.mxu0 0.0
    %321 = vmatpush1.msra.mxu0 %v118
    %322 = vmatprep.subr.mxu0 0.0
    %323 = vmatpush1.msra.mxu0 %v117
    %324 = vmatprep.subr.mxu0 0.0
    %325 = vmatpush1.msra.mxu0 %v116
    %326 = vmatprep.subr.mxu0 0.0
    %327 = vmatpush1.msra.mxu0 %v115
    %328 = vmatprep.subr.mxu0 0.0
    %329 = vmatpush1.msra.mxu0 %v114
    %330 = vmatprep.subr.mxu0 0.0
    %331 = vmatpush1.msra.mxu0 %v113
    %332 = vmatprep.subr.mxu0 0.0
    %333 = vmatpush1.msra.mxu0 %v112
    %334 = vmatprep.subr.mxu0 0.0
    %335 = vmatpush1.msra.mxu0 %v111
    %336 = vmatprep.subr.mxu0 0.0
    %337 = vmatpush1.msra.mxu0 %v110
    %338 = vmatprep.subr.mxu0 0.0
    %339 = vmatpush1.msra.mxu0 %v109
    %340 = vmatprep.subr.mxu0 0.0
    %341 = vmatpush1.msra.mxu0 %v108
    %342 = vmatprep.subr.mxu0 0.0
    %343 = vmatpush1.msra.mxu0 %v107
    %344 = vmatprep.subr.mxu0 0.0
    %345 = vmatpush1.msra.mxu0 %v106
    %346 = vmatprep.subr.mxu0 0.0
    %347 = vmatpush1.msra.mxu0 %v105
    %348 = vmatprep.subr.mxu0 0.0
    %349 = vmatpush2.msra.mxu0 %v136
    %350 = vmatprep.subr.mxu0 0.0
    %351 = vmatpush2.msra.mxu0 %v135
    %352 = vmatprep.subr.mxu0 0.0
    %353 = vmatpush2.msra.mxu0 %v134
    %354 = vmatprep.subr.mxu0 0.0
    %355 = vmatpush2.msra.mxu0 %v133
    %356 = vmatprep.subr.mxu0 0.0
    %357 = vmatpush2.msra.mxu0 %v132
    %358 = vmatprep.subr.mxu0 0.0
    %359 = vmatpush2.msra.mxu0 %v131
    %360 = vmatprep.subr.mxu0 0.0
    %361 = vmatpush2.msra.mxu0 %v130
    %362 = vmatprep.subr.mxu0 0.0
    %363 = vmatpush2.msra.mxu0 %v129
    %364 = vmatprep.subr.mxu0 0.0
    %365 = vmatpush2.msra.mxu0 %v128
    %366 = vmatprep.subr.mxu0 0.0
    %367 = vmatpush2.msra.mxu0 %v127
    %368 = vmatprep.subr.mxu0 0.0
    %369 = vmatpush2.msra.mxu0 %v126
    %370 = vmatprep.subr.mxu0 0.0
    %371 = vmatpush2.msra.mxu0 %v125
    %372 = vmatprep.subr.mxu0 0.0
    %373 = vmatpush2.msra.mxu0 %v124
    %374 = vmatprep.subr.mxu0 0.0
    %375 = vmatpush2.msra.mxu0 %v123
    %376 = vmatprep.subr.mxu0 0.0
    %377 = vmatpush2.msra.mxu0 %v122
    %378 = vmatprep.subr.mxu0 0.0
    %379 = vmatpush2.msra.mxu0 %v121
    %380 = vmatprep.mubr.f32.mxu0 %v38
    %381 = vmatmul.mubr.f32.gmra.mxu0 %v37
    %v382 = vpop.f32.mrf.mxu0
    %v383 = vadd.f32 %v313, %v382
    %v384 = vpop.f32.mrf.mxu0
    %385 = vdwg.mxu0
    %386 = vmatprep.subr.mxu0 0.0
    %387 = vmatpush1.msra.mxu0 %v152
    %388 = vmatprep.subr.mxu0 0.0
    %389 = vmatpush1.msra.mxu0 %v151
    %390 = vmatprep.subr.mxu0 0.0
    %391 = vmatpush1.msra.mxu0 %v150
    %392 = vmatprep.subr.mxu0 0.0
    %393 = vmatpush1.msra.mxu0 %v149
    %394 = vmatprep.subr.mxu0 0.0
    %395 = vmatpush1.msra.mxu0 %v148
    %396 = vmatprep.subr.mxu0 0.0
    %397 = vmatpush1.msra.mxu0 %v147
    %398 = vmatprep.subr.mxu0 0.0
    %399 = vmatpush1.msra.mxu0 %v146
    %400 = vmatprep.subr.mxu0 0.0
    %401 = vmatpush1.msra.mxu0 %v145
    %402 = vmatprep.subr.mxu0 0.0
    %403 = vmatpush1.msra.mxu0 %v144
    %404 = vmatprep.subr.mxu0 0.0
    %405 = vmatpush1.msra.mxu0 %v143
    %406 = vmatprep.subr.mxu0 0.0
    %407 = vmatpush1.msra.mxu0 %v142
    %408 = vmatprep.subr.mxu0 0.0
    %409 = vmatpush1.msra.mxu0 %v141
    %410 = vmatprep.subr.mxu0 0.0
    %411 = vmatpush1.msra.mxu0 %v140
    %412 = vmatprep.subr.mxu0 0.0
    %413 = vmatpush1.msra.mxu0 %v139
    %414 = vmatprep.subr.mxu0 0.0
    %415 = vmatpush1.msra.mxu0 %v138
    %416 = vmatprep.subr.mxu0 0.0
    %417 = vmatpush1.msra.mxu0 %v137
    %418 = vmatprep.subr.mxu0 0.0
    %419 = vmatpush2.msra.mxu0 %v168
    %420 = vmatprep.subr.mxu0 0.0
    %421 = vmatpush2.msra.mxu0 %v167
    %422 = vmatprep.subr.mxu0 0.0
    %423 = vmatpush2.msra.mxu0 %v166
    %424 = vmatprep.subr.mxu0 0.0
    %425 = vmatpush2.msra.mxu0 %v165
    %426 = vmatprep.subr.mxu0 0.0
    %427 = vmatpush2.msra.mxu0 %v164
    %428 = vmatprep.subr.mxu0 0.0
    %429 = vmatpush2.msra.mxu0 %v163
    %430 = vmatprep.subr.mxu0 0.0
    %431 = vmatpush2.msra.mxu0 %v162
    %432 = vmatprep.subr.mxu0 0.0
    %433 = vmatpush2.msra.mxu0 %v161
    %434 = vmatprep.subr.mxu0 0.0
    %435 = vmatpush2.msra.mxu0 %v160
    %436 = vmatprep.subr.mxu0 0.0
    %437 = vmatpush2.msra.mxu0 %v159
    %438 = vmatprep.subr.mxu0 0.0
    %439 = vmatpush2.msra.mxu0 %v158
    %440 = vmatprep.subr.mxu0 0.0
    %441 = vmatpush2.msra.mxu0 %v157
    %442 = vmatprep.subr.mxu0 0.0
    %443 = vmatpush2.msra.mxu0 %v156
    %444 = vmatprep.subr.mxu0 0.0
    %445 = vmatpush2.msra.mxu0 %v155
    %446 = vmatprep.subr.mxu0 0.0
    %447 = vmatpush2.msra.mxu0 %v154
    %448 = vmatprep.subr.mxu0 0.0
    %449 = vmatpush2.msra.mxu0 %v153
    %450 = vmatprep.mubr.f32.mxu0 %v40
    %451 = vmatmul.mubr.f32.gmra.mxu0 %v39
    %v452 = vpop.f32.mrf.mxu0
    %v453 = vadd.f32 %v383, %v452
    %v454 = vpop.f32.mrf.mxu0
    %455 = vdwg.mxu0
    %v456 = vmax.f32 %v453, 0.0
    %v457 = vsub.f32 0.0, %v453
    %v458 = vmul.f32 %v457, 1.442695
    %v459 = vpow.pop %v458
    %v460 = vadd.f32 %v459, 1.0
    %v461 = vrcp.pop %v460
    %v462 = vmul.f32 1.0, %v461
    %v463 = vand.u32 2147483647, %v453
    %vm464 = vcmp.le.f32.partialorder %v463, 0.7853982
    %vm465 = vcmp.lt.s32.totalorder %v453, 0
    %v466 = vand.u32 %v453, 2139095040
    %v467 = vshrl.u32 %v466, 23
    %v468 = vsub.s32 %v467, 127
    %v469 = vand.u32 2147483647, %v453
    %v470 = vand.u32 %v469, 8388607
    %v471 = vor.u32 %v470, 8388608
    %v472 = vsub.s32 0, %v471
    %v473 = vadd.s32 %v468, 1
    %vm474 = vcmp.gt.s32.totalorder %v473, 0
    %v475 = vsel %vm474, %v473, 0
    %v476 = vshrl.u32 %v475, 5
    %v477 = vand.u32 %v475, 31
    %v478 = vsub.s32 32, %v477
    %v479 = vshrl.u32 683565275, %v478
    %v480 = vshll.u32 683565275, %v477
    %v481 = vshrl.u32 2475754826, %v478
    %v482 = vor.u32 %v480, %v481
    %v483 = vshll.u32 2475754826, %v477
    %v484 = vshrl.u32 2131351028, %v478
    %v485 = vor.u32 %v483, %v484
    %v486 = vshll.u32 2131351028, %v477
    %v487 = vshrl.u32 2102212464, %v478
    %v488 = vor.u32 %v486, %v487
    %v489 = vshll.u32 2102212464, %v477
    %v490 = vshrl.u32 920167782, %v478
    %v491 = vor.u32 %v489, %v490
    %v492 = vshll.u32 920167782, %v477
    %v493 = vshrl.u32 1326507024, %v478
    %v494 = vor.u32 %v492, %v493
    %vm495 = vcmp.lt.s32.totalorder %v476, 1
    %vm496 = vcmp.lt.s32.totalorder %v476, 2
    %vm497 = vcmp.lt.s32.totalorder %v476, 3
    %vm498 = vcmp.lt.s32.totalorder %v476, 4
    %v499 = vsel %vm495, %v479, %v482
    %v500 = vsel %vm498, %v488, 2102212464
    %v501 = vsel %vm497, %v485, %v500
    %v502 = vsel %vm496, %v499, %v501
    %v503 = vsel %vm495, %v482, %v485
    %v504 = vsel %vm498, %v491, 920167782
    %v505 = vsel %vm497, %v488, %v504
    %v506 = vsel %vm496, %v503, %v505
    %v507 = vsel %vm495, %v485, %v488
    %v508 = vsel %vm498, %v494, 1326507024
    %v509 = vsel %vm497, %v491, %v508
    %v510 = vsel %vm496, %v507, %v509
    %v511 = vshll.u32 %v471, 8
    %v512 = vmul.u32.u64.compose %v511, %v510
    %v513 = vextract.low.u32 %v512
    %v514 = vextract.high.u32 %v512
    %v515 = vmul.u32.u64.compose %v511, %v506
    %v516 = vextract.low.u32 %v515
    %v517 = vextract.high.u32 %v515
    %v518 = vmul.u32 %v511, %v502
    %v519 = vadd.s32 %v514, %v516
    %vm520 = vc.u32 %v514, %v516
    %v521 = vadd.s32 %v517, 1
    %v522 = vsel %vm520, %v521, %v517
    %v523 = vadd.s32 %v518, %v522
    %v524 = vadd.s32 %v523, 536870912
    %v525 = vshrl.u32 %v524, 30
    %v526 = vshll.u32 %v525, 30
    %v527 = vsub.s32 %v523, %v526
    %vm528 = vcmp.lt.s32.totalorder %v527, 0
    %v529 = vsub.s32 0, %v527
    %v530 = vsel %vm528, %v529, %v527
    %v531 = vclz %v530
    %v532 = vsub.s32 %v531, 2
    %vm533 = vcmp.gt.s32.totalorder 0, %v532
    %v534 = vsel %vm533, 0, %v532
    %v535 = vsub.s32 32, %v534
    %v536 = vshll.u32 %v527, %v534
    %v537 = vshrl.u32 %v519, %v535
    %v538 = vor.u32 %v536, %v537
    %v539 = vsub.s32 4294967266, %v534
    %v540 = vadd.s32 %v539, 127
    %v541 = vshll.u32 %v540, 23
    %v542 = vor.u32 4788187, %v541
    %v543 = vand.u32 2147483647, %v542
    %v545 = vcvt.s32.f32 %v538
    %v546 = vmul.f32 %v545, %v543
    %v547 = vxor.u32 %v546, 2147483648
    %v548 = vsel %vm465, %v547, %v546
    %v549 = vsub.s32 4, %v525
    %v550 = vsel %vm465, %v549, %v525
    %v551 = vsel %vm464, %v453, %v548
    %v552 = vsel %vm464, 0, %v550
    %v553 = vcosq.f32.pop %v551
    %v554 = vsinq.f32.pop %v551
    %vm555 = vweird.f32 %v453
    %v556 = vand.u32 %v552, 3
    %vm557 = vcmp.lt.s32.totalorder %v556, 2
    %vm558 = vcmp.eq.s32.totalorder %v556, 0
    %v559 = vxor.u32 %v554, 2147483648
    %v560 = vsel %vm558, %v553, %v559
    %vm561 = vcmp.eq.s32.totalorder %v556, 2
    %v562 = vxor.u32 %v553, 2147483648
    %v563 = vsel %vm561, %v562, %v554
    %v564 = vsel %vm557, %v560, %v563
    %v565 = vsel %vm555, nan, %v564
    %567 = vrot.lane.b32.xlu0 %v462, 20
    %v568 = vpop.permute.xlu0 %567
    %571 = vrot.lane.b32.xlu0 %v565, 40
    %v572 = vpop.permute.xlu0 %571
    %vm574 = vcmask 162816
    %v575 = vsel %vm574, %v456, %v568
    %vm576 = vcmask 326656
    %v577 = vsel %vm576, %v575, %v572
    %v578 = vld [vmem:[%s3] sm:$0xff]
    %v579 = vld [vmem:[%s3 + $0x8] sm:$0xff]
    %v580 = vld [vmem:[%s3 + $0x10] sm:$0xff]
    %v581 = vld [vmem:[%s3 + $0x18] sm:$0xff]
    %v582 = vld [vmem:[%s3 + $0x20] sm:$0xff]
    %v583 = vld [vmem:[%s3 + $0x28] sm:$0xff]
    %v584 = vld [vmem:[%s3 + $0x30] sm:$0xff]
    %v585 = vld [vmem:[%s3 + $0x38] sm:$0xf]
    %v586 = vld [vmem:[%s4] sm:$0x1]
    %v588 = vlaneseq
    %v589 = vshrl.u32 %v588, 7
    %v590 = vsub.s32 0, %v589
    %v591 = vrot.slane %v586, %v590
    %vm593 = vcmask 490496
    %v595 = vsel %vm593, %v577, 0
    %vm597 = vcmask 1043456
    %v599 = vsel %vm597, %v585, 0
    %601 = vmatprep.subr.mxu0 0.0
    %602 = vmatpush1.msra.mxu0 0.0
    %603 = vmatprep.subr.mxu0 0.0
    %604 = vmatpush1.msra.mxu0 0.0
    %605 = vmatprep.subr.mxu0 0.0
    %606 = vmatpush1.msra.mxu0 0.0
    %607 = vmatprep.subr.mxu0 0.0
    %608 = vmatpush1.msra.mxu0 0.0
    %609 = vmatprep.subr.mxu0 0.0
    %610 = vmatpush1.msra.mxu0 0.0
    %611 = vmatprep.subr.mxu0 0.0
    %612 = vmatpush1.msra.mxu0 0.0
    %613 = vmatprep.subr.mxu0 0.0
    %614 = vmatpush1.msra.mxu0 0.0
    %615 = vmatprep.subr.mxu0 0.0
    %616 = vmatpush1.msra.mxu0 0.0
    %617 = vmatprep.subr.mxu0 0.0
    %618 = vmatpush1.msra.mxu0 %v599
    %619 = vmatprep.subr.mxu0 0.0
    %620 = vmatpush1.msra.mxu0 %v584
    %621 = vmatprep.subr.mxu0 0.0
    %622 = vmatpush1.msra.mxu0 %v583
    %623 = vmatprep.subr.mxu0 0.0
    %624 = vmatpush1.msra.mxu0 %v582
    %625 = vmatprep.subr.mxu0 0.0
    %626 = vmatpush1.msra.mxu0 %v581
    %627 = vmatprep.subr.mxu0 0.0
    %628 = vmatpush1.msra.mxu0 %v580
    %629 = vmatprep.subr.mxu0 0.0
    %630 = vmatpush1.msra.mxu0 %v579
    %631 = vmatprep.subr.mxu0 0.0
    %632 = vmatpush1.msra.mxu0 %v578
    %633 = vmatprep.subr.mxu0 0.0
    %634 = vmatpush2.msra.mxu0 0.0
    %635 = vmatprep.subr.mxu0 0.0
    %636 = vmatpush2.msra.mxu0 0.0
    %637 = vmatprep.subr.mxu0 0.0
    %638 = vmatpush2.msra.mxu0 0.0
    %639 = vmatprep.subr.mxu0 0.0
    %640 = vmatpush2.msra.mxu0 0.0
    %641 = vmatprep.subr.mxu0 0.0
    %642 = vmatpush2.msra.mxu0 0.0
    %643 = vmatprep.subr.mxu0 0.0
    %644 = vmatpush2.msra.mxu0 0.0
    %645 = vmatprep.subr.mxu0 0.0
    %646 = vmatpush2.msra.mxu0 0.0
    %647 = vmatprep.subr.mxu0 0.0
    %648 = vmatpush2.msra.mxu0 0.0
    %649 = vmatprep.subr.mxu0 0.0
    %650 = vmatpush2.msra.mxu0 0.0
    %651 = vmatprep.subr.mxu0 0.0
    %652 = vmatpush2.msra.mxu0 0.0
    %653 = vmatprep.subr.mxu0 0.0
    %654 = vmatpush2.msra.mxu0 0.0
    %655 = vmatprep.subr.mxu0 0.0
    %656 = vmatpush2.msra.mxu0 0.0
    %657 = vmatprep.subr.mxu0 0.0
    %658 = vmatpush2.msra.mxu0 0.0
    %659 = vmatprep.subr.mxu0 0.0
    %660 = vmatpush2.msra.mxu0 0.0
    %661 = vmatprep.subr.mxu0 0.0
    %662 = vmatpush2.msra.mxu0 0.0
    %663 = vmatprep.subr.mxu0 0.0
    %664 = vmatpush2.msra.mxu0 0.0
    %665 = vmatprep.mubr.f32.mxu0 0.0
    %666 = vmatmul.mubr.f32.gmra.mxu0 %v595
    %v667 = vpop.f32.mrf.mxu0
    %v668 = vadd.f32 %v591, %v667
    %v669 = vpop.f32.mrf.mxu0
    %670 = vdwg.mxu0
    %v671 = vmax.f32 %v668, 0.0
    %v672 = vsub.f32 0.0, %v668
    %v673 = vmul.f32 %v672, 1.442695
    %v674 = vpow.pop %v673
    %v675 = vadd.f32 %v674, 1.0
    %v676 = vrcp.pop %v675
    %v677 = vmul.f32 1.0, %v676
    %v678 = vand.u32 2147483647, %v668
    %vm679 = vcmp.le.f32.partialorder %v678, 0.7853982
    %vm680 = vcmp.lt.s32.totalorder %v668, 0
    %v681 = vand.u32 %v668, 2139095040
    %v682 = vshrl.u32 %v681, 23
    %v683 = vsub.s32 %v682, 127
    %v684 = vand.u32 2147483647, %v668
    %v685 = vand.u32 %v684, 8388607
    %v686 = vor.u32 %v685, 8388608
    %v687 = vsub.s32 0, %v686
    %v688 = vadd.s32 %v683, 1
    %vm689 = vcmp.gt.s32.totalorder %v688, 0
    %v690 = vsel %vm689, %v688, 0
    %v691 = vshrl.u32 %v690, 5
    %v692 = vand.u32 %v690, 31
    %v693 = vsub.s32 32, %v692
    %v694 = vshrl.u32 683565275, %v693
    %v695 = vshll.u32 683565275, %v692
    %v696 = vshrl.u32 2475754826, %v693
    %v697 = vor.u32 %v695, %v696
    %v698 = vshll.u32 2475754826, %v692
    %v699 = vshrl.u32 2131351028, %v693
    %v700 = vor.u32 %v698, %v699
    %v701 = vshll.u32 2131351028, %v692
    %v702 = vshrl.u32 2102212464, %v693
    %v703 = vor.u32 %v701, %v702
    %v704 = vshll.u32 2102212464, %v692
    %v705 = vshrl.u32 920167782, %v693
    %v706 = vor.u32 %v704, %v705
    %v707 = vshll.u32 920167782, %v692
    %v708 = vshrl.u32 1326507024, %v693
    %v709 = vor.u32 %v707, %v708
    %vm710 = vcmp.lt.s32.totalorder %v691, 1
    %vm711 = vcmp.lt.s32.totalorder %v691, 2
    %vm712 = vcmp.lt.s32.totalorder %v691, 3
    %vm713 = vcmp.lt.s32.totalorder %v691, 4
    %v714 = vsel %vm710, %v694, %v697
    %v715 = vsel %vm713, %v703, 2102212464
    %v716 = vsel %vm712, %v700, %v715
    %v717 = vsel %vm711, %v714, %v716
    %v718 = vsel %vm710, %v697, %v700
    %v719 = vsel %vm713, %v706, 920167782
    %v720 = vsel %vm712, %v703, %v719
    %v721 = vsel %vm711, %v718, %v720
    %v722 = vsel %vm710, %v700, %v703
    %v723 = vsel %vm713, %v709, 1326507024
    %v724 = vsel %vm712, %v706, %v723
    %v725 = vsel %vm711, %v722, %v724
    %v726 = vshll.u32 %v686, 8
    %v727 = vmul.u32.u64.compose %v726, %v725
    %v728 = vextract.low.u32 %v727
    %v729 = vextract.high.u32 %v727
    %v730 = vmul.u32.u64.compose %v726, %v721
    %v731 = vextract.low.u32 %v730
    %v732 = vextract.high.u32 %v730
    %v733 = vmul.u32 %v726, %v717
    %v734 = vadd.s32 %v729, %v731
    %vm735 = vc.u32 %v729, %v731
    %v736 = vadd.s32 %v732, 1
    %v737 = vsel %vm735, %v736, %v732
    %v738 = vadd.s32 %v733, %v737
    %v739 = vadd.s32 %v738, 536870912
    %v740 = vshrl.u32 %v739, 30
    %v741 = vshll.u32 %v740, 30
    %v742 = vsub.s32 %v738, %v741
    %vm743 = vcmp.lt.s32.totalorder %v742, 0
    %v744 = vsub.s32 0, %v742
    %v745 = vsel %vm743, %v744, %v742
    %v746 = vclz %v745
    %v747 = vsub.s32 %v746, 2
    %vm748 = vcmp.gt.s32.totalorder 0, %v747
    %v749 = vsel %vm748, 0, %v747
    %v750 = vsub.s32 32, %v749
    %v751 = vshll.u32 %v742, %v749
    %v752 = vshrl.u32 %v734, %v750
    %v753 = vor.u32 %v751, %v752
    %v754 = vsub.s32 4294967266, %v749
    %v755 = vadd.s32 %v754, 127
    %v756 = vshll.u32 %v755, 23
    %v757 = vor.u32 4788187, %v756
    %v758 = vand.u32 2147483647, %v757
    %v760 = vcvt.s32.f32 %v753
    %v761 = vmul.f32 %v760, %v758
    %v762 = vxor.u32 %v761, 2147483648
    %v763 = vsel %vm680, %v762, %v761
    %v764 = vsub.s32 4, %v740
    %v765 = vsel %vm680, %v764, %v740
    %v766 = vsel %vm679, %v668, %v763
    %v767 = vsel %vm679, 0, %v765
    %v768 = vcosq.f32.pop %v766
    %v769 = vsinq.f32.pop %v766
    %vm770 = vweird.f32 %v668
    %v771 = vand.u32 %v767, 3
    %vm772 = vcmp.lt.s32.totalorder %v771, 2
    %vm773 = vcmp.eq.s32.totalorder %v771, 0
    %v774 = vxor.u32 %v769, 2147483648
    %v775 = vsel %vm773, %v768, %v774
    %vm776 = vcmp.eq.s32.totalorder %v771, 2
    %v777 = vxor.u32 %v768, 2147483648
    %v778 = vsel %vm776, %v777, %v769
    %v779 = vsel %vm772, %v775, %v778
    %v780 = vsel %vm770, nan, %v779
    %782 = vrot.lane.b32.xlu0 %v677, 20
    %v783 = vpop.permute.xlu0 %782
    %786 = vrot.lane.b32.xlu0 %v780, 40
    %v787 = vpop.permute.xlu0 %786
    %v789 = vsel %vm574, %v671, %v783
    %v790 = vsel %vm576, %v789, %v787
    %v791 = vld [vmem:[%s5] sm:$0xff]
    %v792 = vld [vmem:[%s5 + $0x8] sm:$0xff]
    %v793 = vld [vmem:[%s5 + $0x10] sm:$0xff]
    %v794 = vld [vmem:[%s5 + $0x18] sm:$0xff]
    %v795 = vld [vmem:[%s5 + $0x20] sm:$0xff]
    %v796 = vld [vmem:[%s5 + $0x28] sm:$0xff]
    %v797 = vld [vmem:[%s5 + $0x30] sm:$0xff]
    %v798 = vld [vmem:[%s5 + $0x38] sm:$0xf]
    %v799 = vld [vmem:[%s6] sm:$0x1]
    %v801 = vlaneseq
    %v802 = vshrl.u32 %v801, 7
    %v803 = vsub.s32 0, %v802
    %v804 = vrot.slane %v799, %v803
    %v807 = vsel %vm593, %v790, 0
    %v810 = vsel %vm597, %v798, 0
    %812 = vmatprep.subr.mxu0 0.0
    %813 = vmatpush1.msra.mxu0 0.0
    %814 = vmatprep.subr.mxu0 0.0
    %815 = vmatpush1.msra.mxu0 0.0
    %816 = vmatprep.subr.mxu0 0.0
    %817 = vmatpush1.msra.mxu0 0.0
    %818 = vmatprep.subr.mxu0 0.0
    %819 = vmatpush1.msra.mxu0 0.0
    %820 = vmatprep.subr.mxu0 0.0
    %821 = vmatpush1.msra.mxu0 0.0
    %822 = vmatprep.subr.mxu0 0.0
    %823 = vmatpush1.msra.mxu0 0.0
    %824 = vmatprep.subr.mxu0 0.0
    %825 = vmatpush1.msra.mxu0 0.0
    %826 = vmatprep.subr.mxu0 0.0
    %827 = vmatpush1.msra.mxu0 0.0
    %828 = vmatprep.subr.mxu0 0.0
    %829 = vmatpush1.msra.mxu0 %v810
    %830 = vmatprep.subr.mxu0 0.0
    %831 = vmatpush1.msra.mxu0 %v797
    %832 = vmatprep.subr.mxu0 0.0
    %833 = vmatpush1.msra.mxu0 %v796
    %834 = vmatprep.subr.mxu0 0.0
    %835 = vmatpush1.msra.mxu0 %v795
    %836 = vmatprep.subr.mxu0 0.0
    %837 = vmatpush1.msra.mxu0 %v794
    %838 = vmatprep.subr.mxu0 0.0
    %839 = vmatpush1.msra.mxu0 %v793
    %840 = vmatprep.subr.mxu0 0.0
    %841 = vmatpush1.msra.mxu0 %v792
    %842 = vmatprep.subr.mxu0 0.0
    %843 = vmatpush1.msra.mxu0 %v791
    %844 = vmatprep.subr.mxu0 0.0
    %845 = vmatpush2.msra.mxu0 0.0
    %846 = vmatprep.subr.mxu0 0.0
    %847 = vmatpush2.msra.mxu0 0.0
    %848 = vmatprep.subr.mxu0 0.0
    %849 = vmatpush2.msra.mxu0 0.0
    %850 = vmatprep.subr.mxu0 0.0
    %851 = vmatpush2.msra.mxu0 0.0
    %852 = vmatprep.subr.mxu0 0.0
    %853 = vmatpush2.msra.mxu0 0.0
    %854 = vmatprep.subr.mxu0 0.0
    %855 = vmatpush2.msra.mxu0 0.0
    %856 = vmatprep.subr.mxu0 0.0
    %857 = vmatpush2.msra.mxu0 0.0
    %858 = vmatprep.subr.mxu0 0.0
    %859 = vmatpush2.msra.mxu0 0.0
    %860 = vmatprep.subr.mxu0 0.0
    %861 = vmatpush2.msra.mxu0 0.0
    %862 = vmatprep.subr.mxu0 0.0
    %863 = vmatpush2.msra.mxu0 0.0
    %864 = vmatprep.subr.mxu0 0.0
    %865 = vmatpush2.msra.mxu0 0.0
    %866 = vmatprep.subr.mxu0 0.0
    %867 = vmatpush2.msra.mxu0 0.0
    %868 = vmatprep.subr.mxu0 0.0
    %869 = vmatpush2.msra.mxu0 0.0
    %870 = vmatprep.subr.mxu0 0.0
    %871 = vmatpush2.msra.mxu0 0.0
    %872 = vmatprep.subr.mxu0 0.0
    %873 = vmatpush2.msra.mxu0 0.0
    %874 = vmatprep.subr.mxu0 0.0
    %875 = vmatpush2.msra.mxu0 0.0
    %876 = vmatprep.mubr.f32.mxu0 0.0
    %877 = vmatmul.mubr.f32.gmra.mxu0 %v807
    %v878 = vpop.f32.mrf.mxu0
    %v879 = vadd.f32 %v804, %v878
    %v880 = vpop.f32.mrf.mxu0
    %881 = vdwg.mxu0
    %v882 = vmax.f32 %v879, 0.0
    %v883 = vsub.f32 0.0, %v879
    %v884 = vmul.f32 %v883, 1.442695
    %v885 = vpow.pop %v884
    %v886 = vadd.f32 %v885, 1.0
    %v887 = vrcp.pop %v886
    %v888 = vmul.f32 1.0, %v887
    %v889 = vand.u32 2147483647, %v879
    %vm890 = vcmp.le.f32.partialorder %v889, 0.7853982
    %vm891 = vcmp.lt.s32.totalorder %v879, 0
    %v892 = vand.u32 %v879, 2139095040
    %v893 = vshrl.u32 %v892, 23
    %v894 = vsub.s32 %v893, 127
    %v895 = vand.u32 2147483647, %v879
    %v896 = vand.u32 %v895, 8388607
    %v897 = vor.u32 %v896, 8388608
    %v898 = vsub.s32 0, %v897
    %v899 = vadd.s32 %v894, 1
    %vm900 = vcmp.gt.s32.totalorder %v899, 0
    %v901 = vsel %vm900, %v899, 0
    %v902 = vshrl.u32 %v901, 5
    %v903 = vand.u32 %v901, 31
    %v904 = vsub.s32 32, %v903
    %v905 = vshrl.u32 683565275, %v904
    %v906 = vshll.u32 683565275, %v903
    %v907 = vshrl.u32 2475754826, %v904
    %v908 = vor.u32 %v906, %v907
    %v909 = vshll.u32 2475754826, %v903
    %v910 = vshrl.u32 2131351028, %v904
    %v911 = vor.u32 %v909, %v910
    %v912 = vshll.u32 2131351028, %v903
    %v913 = vshrl.u32 2102212464, %v904
    %v914 = vor.u32 %v912, %v913
    %v915 = vshll.u32 2102212464, %v903
    %v916 = vshrl.u32 920167782, %v904
    %v917 = vor.u32 %v915, %v916
    %v918 = vshll.u32 920167782, %v903
    %v919 = vshrl.u32 1326507024, %v904
    %v920 = vor.u32 %v918, %v919
    %vm921 = vcmp.lt.s32.totalorder %v902, 1
    %vm922 = vcmp.lt.s32.totalorder %v902, 2
    %vm923 = vcmp.lt.s32.totalorder %v902, 3
    %vm924 = vcmp.lt.s32.totalorder %v902, 4
    %v925 = vsel %vm921, %v905, %v908
    %v926 = vsel %vm924, %v914, 2102212464
    %v927 = vsel %vm923, %v911, %v926
    %v928 = vsel %vm922, %v925, %v927
    %v929 = vsel %vm921, %v908, %v911
    %v930 = vsel %vm924, %v917, 920167782
    %v931 = vsel %vm923, %v914, %v930
    %v932 = vsel %vm922, %v929, %v931
    %v933 = vsel %vm921, %v911, %v914
    %v934 = vsel %vm924, %v920, 1326507024
    %v935 = vsel %vm923, %v917, %v934
    %v936 = vsel %vm922, %v933, %v935
    %v937 = vshll.u32 %v897, 8
    %v938 = vmul.u32.u64.compose %v937, %v936
    %v939 = vextract.low.u32 %v938
    %v940 = vextract.high.u32 %v938
    %v941 = vmul.u32.u64.compose %v937, %v932
    %v942 = vextract.low.u32 %v941
    %v943 = vextract.high.u32 %v941
    %v944 = vmul.u32 %v937, %v928
    %v945 = vadd.s32 %v940, %v942
    %vm946 = vc.u32 %v940, %v942
    %v947 = vadd.s32 %v943, 1
    %v948 = vsel %vm946, %v947, %v943
    %v949 = vadd.s32 %v944, %v948
    %v950 = vadd.s32 %v949, 536870912
    %v951 = vshrl.u32 %v950, 30
    %v952 = vshll.u32 %v951, 30
    %v953 = vsub.s32 %v949, %v952
    %vm954 = vcmp.lt.s32.totalorder %v953, 0
    %v955 = vsub.s32 0, %v953
    %v956 = vsel %vm954, %v955, %v953
    %v957 = vclz %v956
    %v958 = vsub.s32 %v957, 2
    %vm959 = vcmp.gt.s32.totalorder 0, %v958
    %v960 = vsel %vm959, 0, %v958
    %v961 = vsub.s32 32, %v960
    %v962 = vshll.u32 %v953, %v960
    %v963 = vshrl.u32 %v945, %v961
    %v964 = vor.u32 %v962, %v963
    %v965 = vsub.s32 4294967266, %v960
    %v966 = vadd.s32 %v965, 127
    %v967 = vshll.u32 %v966, 23
    %v968 = vor.u32 4788187, %v967
    %v969 = vand.u32 2147483647, %v968
    %v971 = vcvt.s32.f32 %v964
    %v972 = vmul.f32 %v971, %v969
    %v973 = vxor.u32 %v972, 2147483648
    %v974 = vsel %vm891, %v973, %v972
    %v975 = vsub.s32 4, %v951
    %v976 = vsel %vm891, %v975, %v951
    %v977 = vsel %vm890, %v879, %v974
    %v978 = vsel %vm890, 0, %v976
    %v979 = vcosq.f32.pop %v977
    %v980 = vsinq.f32.pop %v977
    %vm981 = vweird.f32 %v879
    %v982 = vand.u32 %v978, 3
    %vm983 = vcmp.lt.s32.totalorder %v982, 2
    %vm984 = vcmp.eq.s32.totalorder %v982, 0
    %v985 = vxor.u32 %v980, 2147483648
    %v986 = vsel %vm984, %v979, %v985
    %vm987 = vcmp.eq.s32.totalorder %v982, 2
    %v988 = vxor.u32 %v979, 2147483648
    %v989 = vsel %vm987, %v988, %v980
    %v990 = vsel %vm983, %v986, %v989
    %v991 = vsel %vm981, nan, %v990
    %993 = vrot.lane.b32.xlu0 %v888, 20
    %v994 = vpop.permute.xlu0 %993
    %997 = vrot.lane.b32.xlu0 %v991, 40
    %v998 = vpop.permute.xlu0 %997
    %v1000 = vsel %vm574, %v882, %v994
    %v1001 = vsel %vm576, %v1000, %v998
    %v1002 = vld [vmem:[%s7] sm:$0xff]
    %v1003 = vld [vmem:[%s7 + $0x8] sm:$0xff]
    %v1004 = vld [vmem:[%s7 + $0x10] sm:$0xff]
    %v1005 = vld [vmem:[%s7 + $0x18] sm:$0xff]
    %v1006 = vld [vmem:[%s7 + $0x20] sm:$0xff]
    %v1007 = vld [vmem:[%s7 + $0x28] sm:$0xff]
    %v1008 = vld [vmem:[%s7 + $0x30] sm:$0xff]
    %v1009 = vld [vmem:[%s7 + $0x38] sm:$0xf]
    %v1010 = vld [vmem:[%s8] sm:$0x1]
    %v1012 = vlaneseq
    %v1013 = vshrl.u32 %v1012, 7
    %v1014 = vsub.s32 0, %v1013
    %v1015 = vrot.slane %v1010, %v1014
    %v1018 = vsel %vm593, %v1001, 0
    %v1021 = vsel %vm597, %v1009, 0
    %1023 = vmatprep.subr.mxu0 0.0
    %1024 = vmatpush1.msra.mxu0 0.0
    %1025 = vmatprep.subr.mxu0 0.0
    %1026 = vmatpush1.msra.mxu0 0.0
    %1027 = vmatprep.subr.mxu0 0.0
    %1028 = vmatpush1.msra.mxu0 0.0
    %1029 = vmatprep.subr.mxu0 0.0
    %1030 = vmatpush1.msra.mxu0 0.0
    %1031 = vmatprep.subr.mxu0 0.0
    %1032 = vmatpush1.msra.mxu0 0.0
    %1033 = vmatprep.subr.mxu0 0.0
    %1034 = vmatpush1.msra.mxu0 0.0
    %1035 = vmatprep.subr.mxu0 0.0
    %1036 = vmatpush1.msra.mxu0 0.0
    %1037 = vmatprep.subr.mxu0 0.0
    %1038 = vmatpush1.msra.mxu0 0.0
    %1039 = vmatprep.subr.mxu0 0.0
    %1040 = vmatpush1.msra.mxu0 %v1021
    %1041 = vmatprep.subr.mxu0 0.0
    %1042 = vmatpush1.msra.mxu0 %v1008
    %1043 = vmatprep.subr.mxu0 0.0
    %1044 = vmatpush1.msra.mxu0 %v1007
    %1045 = vmatprep.subr.mxu0 0.0
    %1046 = vmatpush1.msra.mxu0 %v1006
    %1047 = vmatprep.subr.mxu0 0.0
    %1048 = vmatpush1.msra.mxu0 %v1005
    %1049 = vmatprep.subr.mxu0 0.0
    %1050 = vmatpush1.msra.mxu0 %v1004
    %1051 = vmatprep.subr.mxu0 0.0
    %1052 = vmatpush1.msra.mxu0 %v1003
    %1053 = vmatprep.subr.mxu0 0.0
    %1054 = vmatpush1.msra.mxu0 %v1002
    %1055 = vmatprep.subr.mxu0 0.0
    %1056 = vmatpush2.msra.mxu0 0.0
    %1057 = vmatprep.subr.mxu0 0.0
    %1058 = vmatpush2.msra.mxu0 0.0
    %1059 = vmatprep.subr.mxu0 0.0
    %1060 = vmatpush2.msra.mxu0 0.0
    %1061 = vmatprep.subr.mxu0 0.0
    %1062 = vmatpush2.msra.mxu0 0.0
    %1063 = vmatprep.subr.mxu0 0.0
    %1064 = vmatpush2.msra.mxu0 0.0
    %1065 = vmatprep.subr.mxu0 0.0
    %1066 = vmatpush2.msra.mxu0 0.0
    %1067 = vmatprep.subr.mxu0 0.0
    %1068 = vmatpush2.msra.mxu0 0.0
    %1069 = vmatprep.subr.mxu0 0.0
    %1070 = vmatpush2.msra.mxu0 0.0
    %1071 = vmatprep.subr.mxu0 0.0
    %1072 = vmatpush2.msra.mxu0 0.0
    %1073 = vmatprep.subr.mxu0 0.0
    %1074 = vmatpush2.msra.mxu0 0.0
    %1075 = vmatprep.subr.mxu0 0.0
    %1076 = vmatpush2.msra.mxu0 0.0
    %1077 = vmatprep.subr.mxu0 0.0
    %1078 = vmatpush2.msra.mxu0 0.0
    %1079 = vmatprep.subr.mxu0 0.0
    %1080 = vmatpush2.msra.mxu0 0.0
    %1081 = vmatprep.subr.mxu0 0.0
    %1082 = vmatpush2.msra.mxu0 0.0
    %1083 = vmatprep.subr.mxu0 0.0
    %1084 = vmatpush2.msra.mxu0 0.0
    %1085 = vmatprep.subr.mxu0 0.0
    %1086 = vmatpush2.msra.mxu0 0.0
    %1087 = vmatprep.mubr.f32.mxu0 0.0
    %1088 = vmatmul.mubr.f32.gmra.mxu0 %v1018
    %v1089 = vpop.f32.mrf.mxu0
    %v1090 = vadd.f32 %v1015, %v1089
    %v1091 = vpop.f32.mrf.mxu0
    %1092 = vdwg.mxu0
    %1093 = vst [vmem:[#allocation2] sm:$0xff] %v1090
    // Predicated region
    $region38: #{tpu_custom_call.1} parent=1 // pred_check
      _
    $region39: #{tpu_custom_call.1} parent=1 // pred_check_branch
      %1095 = sbr.rel (0) target = $region41
    $region40: #{tpu_custom_call.1} parent=1 // pred_region
      %s1097 = ssub.s32 128, 128
      %1098 = vsyncadd [#allocation3], %s1097
      %s1100 = sshll.u32 [#allocation2], 4
      %s1101 = int_to_ptr.vmem [resolvable:$true] %s1100
      %1103 = dma.vmem_to_hbm [thread:$0]  %s1101, 128, %s9, [#allocation3]
    $region41: #{tpu_custom_call.1} parent=1 // pred_fallthru
      _
    // Predicated region
    $region42: #{tpu_custom_call.1} parent=1 // pred_check
      _
    $region43: #{tpu_custom_call.1} parent=1 // pred_check_branch
      %1105 = sbr.rel (0) target = $region45
    $region44: #{tpu_custom_call.1} parent=1 // pred_region
      %1106 = dma.done [#allocation3], 128
    $region45: #{tpu_custom_call.1} parent=1 // pred_fallthru
      _
    %1107 = vsyncpa [#allocation3], 1

</llo_original>
